<compile_context>
chip_gen: v7x
topology: tpu7x:2x2x1
jax: 0.10.0
libtpu: 0.0.40
codegen_flags: <defaults>
</compile_context>

<pallas_src>
import jax
import jax.numpy as jnp
from jax.experimental import pallas as pl
from jax.experimental.pallas import tpu as pltpu


def _softplus(x):
    # Numerically stable softplus: max(x, 0) + log1p(exp(-|x|)).
    return jnp.maximum(x, 0.0) + jnp.log1p(jnp.exp(-jnp.abs(x)))


def net_kernel(x_ref, w1_ref, b1_ref, w2_ref, b2_ref, w3_ref, b3_ref, o_ref):
    x = x_ref[...]

    # fc1 + ReLU
    h1 = jnp.dot(x, w1_ref[...], preferred_element_type=jnp.float32) + b1_ref[...]
    h1 = jnp.maximum(h1, 0.0)

    # fc2 + ReLU
    h2 = jnp.dot(h1, w2_ref[...], preferred_element_type=jnp.float32) + b2_ref[...]
    h2 = jnp.maximum(h2, 0.0)

    # fc3
    logits = jnp.dot(h2, w3_ref[...], preferred_element_type=jnp.float32) + b3_ref[...]

    # 2-class log_softmax closed form (VPU/EUP only, no cross-lane reduce):
    #   lse = l0 + softplus(l1 - l0);  out = logits - lse
    l0 = logits[:, 0:1]
    l1 = logits[:, 1:2]
    lse = l0 + _softplus(l1 - l0)
    o_ref[...] = logits - lse


def _round_up(a, b):
    return ((a + b - 1) // b) * b


def net_forward(x, params, *, tile_n=1024):
    """x: (N, 100) float32; params: dict of (in,out)-layout weights + (1,out) biases."""
    n, f_in = x.shape
    w1, b1 = params["w1"], params["b1"]
    w2, b2 = params["w2"], params["b2"]
    w3, b3 = params["w3"], params["b3"]

    # Tile the batch dimension; pad N up to a multiple of the tile so every
    # block is full (rows of padding are zeros and get sliced off at the end).
    tile = min(tile_n, _round_up(n, 8))
    n_pad = _round_up(n, tile)
    if n_pad != n:
        x = jnp.pad(x, ((0, n_pad - n), (0, 0)))
    grid = (n_pad // tile,)

    # Weights/biases: full block with a constant index_map -> VMEM-resident,
    # never re-fetched across grid steps.
    resident = lambda arr: pl.BlockSpec(arr.shape, lambda i: tuple(0 for _ in arr.shape))

    out = pl.pallas_call(
        net_kernel,
        out_shape=jax.ShapeDtypeStruct((n_pad, 2), jnp.float32),
        grid=grid,
        in_specs=[
            pl.BlockSpec((tile, f_in), lambda i: (i, 0)),   # x: tiled over batch
            resident(w1), resident(b1),
            resident(w2), resident(b2),
            resident(w3), resident(b3),
        ],
        out_specs=pl.BlockSpec((tile, 2), lambda i: (i, 0)),
        compiler_params=pltpu.CompilerParams(
            dimension_semantics=("parallel",),
        ),
    )(x, w1, b1, w2, b2, w3, b3)

    return out[:n]


def init_params(key):
    """Deterministic init mimicking nn.Linear's uniform(-1/sqrt(fan_in), 1/sqrt(fan_in))."""
    ks = jax.random.split(key, 6)

    def linear(kw, kb, fan_in, fan_out):
        bound = 1.0 / jnp.sqrt(float(fan_in))
        w = jax.random.uniform(kw, (fan_in, fan_out), jnp.float32, -bound, bound)
        b = jax.random.uniform(kb, (1, fan_out), jnp.float32, -bound, bound)
        return w, b

    w1, b1 = linear(ks[0], ks[1], 100, 64)
    w2, b2 = linear(ks[2], ks[3], 64, 64)
    w3, b3 = linear(ks[4], ks[5], 64, 2)
    return {"w1": w1, "b1": b1, "w2": w2, "b2": b2, "w3": w3, "b3": b3}


def reference_forward(x, params):
    h1 = jnp.maximum(x @ params["w1"] + params["b1"], 0.0)
    h2 = jnp.maximum(h1 @ params["w2"] + params["b2"], 0.0)
    logits = h2 @ params["w3"] + params["b3"]
    return jax.nn.log_softmax(logits, axis=1)


if __name__ == "__main__":
    key = jax.random.PRNGKey(0)
    k_param, k_x = jax.random.split(key)
    params = init_params(k_param)

    # Small check at batch=8 (one tile) ...
    batch = 8
    x = jax.random.normal(k_x, (batch, 100), dtype=jnp.float32)
    out = jax.block_until_ready(net_forward(x, params))
    ref = reference_forward(x, params)
    assert out.shape == (batch, 2)
    assert jnp.allclose(out, ref, atol=1e-5, rtol=1e-5)

    # ... and a multi-tile, non-multiple batch to exercise the grid/padding path.
    batch2 = 2500
    x2 = jax.random.normal(jax.random.PRNGKey(1), (batch2, 100), dtype=jnp.float32)
    out2 = jax.block_until_ready(net_forward(x2, params))
    ref2 = reference_forward(x2, params)
    assert out2.shape == (batch2, 2)
    assert jnp.allclose(out2, ref2, atol=1e-5, rtol=1e-5)

    print("KERNEL_OK")
</pallas_src>

<mosaic_0001>
module attributes {stable_mosaic.version = 11 : i64} {
  func.func @net_kernel(%arg0: i32, %arg1: memref<8x100xf32, #tpu.memory_space<vmem>>, %arg2: memref<100x64xf32, #tpu.memory_space<vmem>>, %arg3: memref<1x64xf32, #tpu.memory_space<vmem>>, %arg4: memref<64x64xf32, #tpu.memory_space<vmem>>, %arg5: memref<1x64xf32, #tpu.memory_space<vmem>>, %arg6: memref<64x2xf32, #tpu.memory_space<vmem>>, %arg7: memref<1x2xf32, #tpu.memory_space<vmem>>, %arg8: memref<8x2xf32, #tpu.memory_space<vmem>>) attributes {dimension_semantics = [#tpu.dimension_semantics<parallel>], iteration_bounds = array<i64: 1>, scalar_prefetch = 0 : i64, scratch_operands = 0 : i64, tpu.core_type = #tpu.core_type<tc>, window_params = [{transform_indices = @transform_0, window_bounds = array<i64: 8, 100>}, {pipeline_mode = #tpu.pipeline_mode<synchronous>, transform_indices = @transform_1, window_bounds = array<i64: 100, 64>}, {pipeline_mode = #tpu.pipeline_mode<synchronous>, transform_indices = @transform_2, window_bounds = array<i64: 1, 64>}, {pipeline_mode = #tpu.pipeline_mode<synchronous>, transform_indices = @transform_3, window_bounds = array<i64: 64, 64>}, {pipeline_mode = #tpu.pipeline_mode<synchronous>, transform_indices = @transform_4, window_bounds = array<i64: 1, 64>}, {pipeline_mode = #tpu.pipeline_mode<synchronous>, transform_indices = @transform_5, window_bounds = array<i64: 64, 2>}, {pipeline_mode = #tpu.pipeline_mode<synchronous>, transform_indices = @transform_6, window_bounds = array<i64: 1, 2>}, {transform_indices = @transform_7, window_bounds = array<i64: 8, 2>}]} {
    %c0 = arith.constant 0 : index
    %c0_0 = arith.constant 0 : index
    %0 = vector.load %arg1[%c0, %c0_0] : memref<8x100xf32, #tpu.memory_space<vmem>>, vector<8x100xf32>
    %c0_1 = arith.constant 0 : index
    %c0_2 = arith.constant 0 : index
    %1 = vector.load %arg2[%c0_1, %c0_2] : memref<100x64xf32, #tpu.memory_space<vmem>>, vector<100x64xf32>
    %cst = arith.constant dense<0.000000e+00> : vector<8x64xf32>
    %2 = tpu.matmul %0, %1, %cst {dimension_numbers = #tpu.dot_dimension_numbers<[1], [0], [0], [1], [0, 0, 1, 1], [], []>} : vector<8x100xf32>, vector<100x64xf32>, vector<8x64xf32> -> vector<8x64xf32>
    %c0_3 = arith.constant 0 : index
    %c0_4 = arith.constant 0 : index
    %3 = vector.load %arg3[%c0_3, %c0_4] : memref<1x64xf32, #tpu.memory_space<vmem>>, vector<1x64xf32>
    %4 = vector.broadcast %3 : vector<1x64xf32> to vector<8x64xf32>
    %5 = arith.addf %2, %4 : vector<8x64xf32>
    %cst_5 = arith.constant 0.000000e+00 : f32
    %6 = vector.broadcast %cst_5 : f32 to vector<8x64xf32>
    %7 = arith.maximumf %5, %6 : vector<8x64xf32>
    %c0_6 = arith.constant 0 : index
    %c0_7 = arith.constant 0 : index
    %8 = vector.load %arg4[%c0_6, %c0_7] : memref<64x64xf32, #tpu.memory_space<vmem>>, vector<64x64xf32>
    %cst_8 = arith.constant dense<0.000000e+00> : vector<8x64xf32>
    %9 = tpu.matmul %7, %8, %cst_8 {dimension_numbers = #tpu.dot_dimension_numbers<[1], [0], [0], [1], [0, 0, 1, 1], [], []>} : vector<8x64xf32>, vector<64x64xf32>, vector<8x64xf32> -> vector<8x64xf32>
    %c0_9 = arith.constant 0 : index
    %c0_10 = arith.constant 0 : index
    %10 = vector.load %arg5[%c0_9, %c0_10] : memref<1x64xf32, #tpu.memory_space<vmem>>, vector<1x64xf32>
    %11 = vector.broadcast %10 : vector<1x64xf32> to vector<8x64xf32>
    %12 = arith.addf %9, %11 : vector<8x64xf32>
    %cst_11 = arith.constant 0.000000e+00 : f32
    %13 = vector.broadcast %cst_11 : f32 to vector<8x64xf32>
    %14 = arith.maximumf %12, %13 : vector<8x64xf32>
    %c0_12 = arith.constant 0 : index
    %c0_13 = arith.constant 0 : index
    %15 = vector.load %arg6[%c0_12, %c0_13] : memref<64x2xf32, #tpu.memory_space<vmem>>, vector<64x2xf32>
    %cst_14 = arith.constant dense<0.000000e+00> : vector<8x2xf32>
    %16 = tpu.matmul %14, %15, %cst_14 {dimension_numbers = #tpu.dot_dimension_numbers<[1], [0], [0], [1], [0, 0, 1, 1], [], []>} : vector<8x64xf32>, vector<64x2xf32>, vector<8x2xf32> -> vector<8x2xf32>
    %c0_15 = arith.constant 0 : index
    %c0_16 = arith.constant 0 : index
    %17 = vector.load %arg7[%c0_15, %c0_16] : memref<1x2xf32, #tpu.memory_space<vmem>>, vector<1x2xf32>
    %18 = vector.broadcast %17 : vector<1x2xf32> to vector<8x2xf32>
    %19 = arith.addf %16, %18 : vector<8x2xf32>
    %20 = vector.extract_strided_slice %19 {offsets = [0, 0], sizes = [8, 1], strides = [1, 1]} : vector<8x2xf32> to vector<8x1xf32>
    %21 = vector.extract_strided_slice %19 {offsets = [0, 1], sizes = [8, 1], strides = [1, 1]} : vector<8x2xf32> to vector<8x1xf32>
    %22 = arith.subf %21, %20 : vector<8x1xf32>
    %cst_17 = arith.constant 0.000000e+00 : f32
    %23 = vector.broadcast %cst_17 : f32 to vector<8x1xf32>
    %24 = arith.maximumf %22, %23 : vector<8x1xf32>
    %25 = math.absf %22 : vector<8x1xf32>
    %cst_18 = arith.constant 0.000000e+00 : f32
    %26 = vector.broadcast %cst_18 : f32 to vector<8x1xf32>
    %27 = arith.subf %26, %25 : vector<8x1xf32>
    %28 = math.exp %27 : vector<8x1xf32>
    %29 = math.log1p %28 : vector<8x1xf32>
    %30 = arith.addf %24, %29 : vector<8x1xf32>
    %31 = arith.addf %20, %30 : vector<8x1xf32>
    %32 = vector.broadcast %31 : vector<8x1xf32> to vector<8x2xf32>
    %33 = arith.subf %19, %32 : vector<8x2xf32>
    %c0_19 = arith.constant 0 : index
    %c0_20 = arith.constant 0 : index
    %34 = vector.load %arg8[%c0_19, %c0_20] : memref<8x2xf32, #tpu.memory_space<vmem>>, vector<8x2xf32>
    tpu.vector_store %arg8[%c0_19, %c0_20], %33 {strides = array<i32>} : memref<8x2xf32, #tpu.memory_space<vmem>>, vector<8x2xf32>,
    return
  }
  func.func @transform_0(%arg0: i32) -> (i32, i32) {
    %c0_i32 = arith.constant 0 : i32
    %c0_i32_0 = arith.constant 0 : i32
    return %arg0, %c0_i32 : i32, i32
  }
  func.func @transform_1(%arg0: i32) -> (i32, i32) {
    %c0_i32 = arith.constant 0 : i32
    %c0_i32_0 = arith.constant 0 : i32
    %c0_i32_1 = arith.constant 0 : i32
    return %c0_i32, %c0_i32_0 : i32, i32
  }
  func.func @transform_2(%arg0: i32) -> (i32, i32) {
    %c0_i32 = arith.constant 0 : i32
    %c0_i32_0 = arith.constant 0 : i32
    %c0_i32_1 = arith.constant 0 : i32
    return %c0_i32, %c0_i32_0 : i32, i32
  }
  func.func @transform_3(%arg0: i32) -> (i32, i32) {
    %c0_i32 = arith.constant 0 : i32
    %c0_i32_0 = arith.constant 0 : i32
    %c0_i32_1 = arith.constant 0 : i32
    return %c0_i32, %c0_i32_0 : i32, i32
  }
  func.func @transform_4(%arg0: i32) -> (i32, i32) {
    %c0_i32 = arith.constant 0 : i32
    %c0_i32_0 = arith.constant 0 : i32
    %c0_i32_1 = arith.constant 0 : i32
    return %c0_i32, %c0_i32_0 : i32, i32
  }
  func.func @transform_5(%arg0: i32) -> (i32, i32) {
    %c0_i32 = arith.constant 0 : i32
    %c0_i32_0 = arith.constant 0 : i32
    %c0_i32_1 = arith.constant 0 : i32
    return %c0_i32, %c0_i32_0 : i32, i32
  }
  func.func @transform_6(%arg0: i32) -> (i32, i32) {
    %c0_i32 = arith.constant 0 : i32
    %c0_i32_0 = arith.constant 0 : i32
    %c0_i32_1 = arith.constant 0 : i32
    return %c0_i32, %c0_i32_0 : i32, i32
  }
  func.func @transform_7(%arg0: i32) -> (i32, i32) {
    %c0_i32 = arith.constant 0 : i32
    %c0_i32_0 = arith.constant 0 : i32
    return %arg0, %c0_i32 : i32, i32
  }
}

</mosaic_0001>

<llo_original>
// kernel: tpu_custom_call.1
$region0: #{tpu_custom_call.1}
  #allocation0 [shape = 'u32[]', space=smem, size = 0x4, offset = 0x4, fixed_abs, tag = 'smem constant byte address 0x4 - core index']
  #allocation1 [shape = 'u32[144,128]{1,0:T(1,128)}', space=vmem, size = 0x12000, scoped, tag = 'internal scratch']
  %s0 = inlined_call_operand.vmem [shape: f32[8,100], index: 0, kind: input, shape index: {}]
  %s1 = inlined_call_operand.vmem [shape: f32[100,64], index: 1, kind: input, shape index: {}]
  %s2 = inlined_call_operand.vmem [shape: f32[1,64], index: 2, kind: input, shape index: {}]
  %s3 = inlined_call_operand.vmem [shape: f32[64,64], index: 3, kind: input, shape index: {}]
  %s4 = inlined_call_operand.vmem [shape: f32[1,64], index: 4, kind: input, shape index: {}]
  %s5 = inlined_call_operand.vmem [shape: f32[64,2], index: 5, kind: input, shape index: {}]
  %s6 = inlined_call_operand.vmem [shape: f32[1,2], index: 6, kind: input, shape index: {}]
  %s7 = inlined_call_operand.vmem [shape: f32[8,2], index: 7, kind: output, shape index: {}]
  %s8 = sld [smem:[#allocation0]]
  $region38: #{tpu_custom_call.1} parent=0
    _
  %s10 = ssub.s32 1, %s8
  %s11 = scalar_select 0, %s10, %s8
  // Predicated region
  $region2: #{tpu_custom_call.1} parent=0 // pred_check
    _
  $region3: #{tpu_custom_call.1} parent=0 // pred_check_branch
    %13 = sbr.rel (0) target = $region5
  $region4: #{tpu_custom_call.1} parent=0 // pred_region
    _
  $region5: #{tpu_custom_call.1} parent=0 // pred_fallthru
    _
  // Predicated region
  $region6: #{tpu_custom_call.1} parent=0 // pred_check
    _
  $region7: #{tpu_custom_call.1} parent=0 // pred_check_branch
    %15 = sbr.rel (0) target = $region9
  $region8: #{tpu_custom_call.1} parent=0 // pred_region
    _
  $region9: #{tpu_custom_call.1} parent=0 // pred_fallthru
    _
  // Predicated region
  $region10: #{tpu_custom_call.1} parent=0 // pred_check
    _
  $region11: #{tpu_custom_call.1} parent=0 // pred_check_branch
    %17 = sbr.rel (0) target = $region13
  $region12: #{tpu_custom_call.1} parent=0 // pred_region
    _
  $region13: #{tpu_custom_call.1} parent=0 // pred_fallthru
    _
  // Predicated region
  $region14: #{tpu_custom_call.1} parent=0 // pred_check
    _
  $region15: #{tpu_custom_call.1} parent=0 // pred_check_branch
    %19 = sbr.rel (0) target = $region17
  $region16: #{tpu_custom_call.1} parent=0 // pred_region
    _
  $region17: #{tpu_custom_call.1} parent=0 // pred_fallthru
    _
  // Predicated region
  $region18: #{tpu_custom_call.1} parent=0 // pred_check
    _
  $region19: #{tpu_custom_call.1} parent=0 // pred_check_branch
    %21 = sbr.rel (0) target = $region21
  $region20: #{tpu_custom_call.1} parent=0 // pred_region
    _
  $region21: #{tpu_custom_call.1} parent=0 // pred_fallthru
    _
  // Predicated region
  $region22: #{tpu_custom_call.1} parent=0 // pred_check
    _
  $region23: #{tpu_custom_call.1} parent=0 // pred_check_branch
    %23 = sbr.rel (0) target = $region25
  $region24: #{tpu_custom_call.1} parent=0 // pred_region
    _
  $region25: #{tpu_custom_call.1} parent=0 // pred_fallthru
    _
  // Predicated region
  $region26: #{tpu_custom_call.1} parent=0 // pred_check
    _
  $region27: #{tpu_custom_call.1} parent=0 // pred_check_branch
    %25 = sbr.rel (0) target = $region29
  $region28: #{tpu_custom_call.1} parent=0 // pred_region
    _
  $region29: #{tpu_custom_call.1} parent=0 // pred_fallthru
    _
  %v26 = vld [vmem:[%s0] sm:$0xff]
  %v27 = vld [vmem:[%s1] sm:$0xff]
  %v28 = vld [vmem:[%s1 + $0x8] sm:$0xff]
  %v29 = vld [vmem:[%s1 + $0x10] sm:$0xff]
  %v30 = vld [vmem:[%s1 + $0x18] sm:$0xff]
  %v31 = vld [vmem:[%s1 + $0x20] sm:$0xff]
  %v32 = vld [vmem:[%s1 + $0x28] sm:$0xff]
  %v33 = vld [vmem:[%s1 + $0x30] sm:$0xff]
  %v34 = vld [vmem:[%s1 + $0x38] sm:$0xff]
  %v35 = vld [vmem:[%s1 + $0x40] sm:$0xff]
  %v36 = vld [vmem:[%s1 + $0x48] sm:$0xff]
  %v37 = vld [vmem:[%s1 + $0x50] sm:$0xff]
  %v38 = vld [vmem:[%s1 + $0x58] sm:$0xff]
  %v39 = vld [vmem:[%s1 + $0x60] sm:$0xf]
  %v40 = vld [vmem:[%s2] sm:$0x1]
  %v42 = vlaneseq
  %v43 = vshrl.u32 %v42, 7
  %v44 = vsub.s32 0, %v43
  %v45 = vrot.slane %v40, %v44
  %vm47 = vcmask 818176
  %v49 = vsel %vm47, %v26, 0
  %vm51 = vcmask 1043456
  %v53 = vsel %vm51, %v39, 0
  %55 = vmatprep.subr.mxu0 0.0
  %56 = vmatpush1.msra.mxu0 %v27
  %57 = vmatprep.subr.mxu0 0.0
  %58 = vmatpush1.msra.mxu0 %v28
  %59 = vmatprep.subr.mxu0 0.0
  %60 = vmatpush1.msra.mxu0 %v29
  %61 = vmatprep.subr.mxu0 0.0
  %62 = vmatpush1.msra.mxu0 %v30
  %63 = vmatprep.subr.mxu0 0.0
  %64 = vmatpush1.msra.mxu0 %v31
  %65 = vmatprep.subr.mxu0 0.0
  %66 = vmatpush1.msra.mxu0 %v32
  %67 = vmatprep.subr.mxu0 0.0
  %68 = vmatpush1.msra.mxu0 %v33
  %69 = vmatprep.subr.mxu0 0.0
  %70 = vmatpush1.msra.mxu0 %v34
  %71 = vmatprep.subr.mxu0 0.0
  %72 = vmatpush1.msra.mxu0 %v35
  %73 = vmatprep.subr.mxu0 0.0
  %74 = vmatpush1.msra.mxu0 %v36
  %75 = vmatprep.subr.mxu0 0.0
  %76 = vmatpush1.msra.mxu0 %v37
  %77 = vmatprep.subr.mxu0 0.0
  %78 = vmatpush1.msra.mxu0 %v38
  %79 = vmatprep.subr.mxu0 0.0
  %80 = vmatpush1.msra.mxu0 %v53
  %81 = vmatprep.subr.mxu0 0.0
  %82 = vmatpush1.msra.mxu0 0.0
  %83 = vmatprep.subr.mxu0 0.0
  %84 = vmatpush1.msra.mxu0 0.0
  %85 = vmatprep.subr.mxu0 0.0
  %86 = vmatpush1.msra.mxu0 0.0
  %87 = vmatprep.subr.mxu0 0.0
  %88 = vmatpush1.msra.mxu0 0.0
  %89 = vmatprep.subr.mxu0 0.0
  %90 = vmatpush1.msra.mxu0 0.0
  %91 = vmatprep.subr.mxu0 0.0
  %92 = vmatpush1.msra.mxu0 0.0
  %93 = vmatprep.subr.mxu0 0.0
  %94 = vmatpush1.msra.mxu0 0.0
  %95 = vmatprep.subr.mxu0 0.0
  %96 = vmatpush1.msra.mxu0 0.0
  %97 = vmatprep.subr.mxu0 0.0
  %98 = vmatpush1.msra.mxu0 0.0
  %99 = vmatprep.subr.mxu0 0.0
  %100 = vmatpush1.msra.mxu0 0.0
  %101 = vmatprep.subr.mxu0 0.0
  %102 = vmatpush1.msra.mxu0 0.0
  %103 = vmatprep.subr.mxu0 0.0
  %104 = vmatpush1.msra.mxu0 0.0
  %105 = vmatprep.subr.mxu0 0.0
  %106 = vmatpush1.msra.mxu0 0.0
  %107 = vmatprep.subr.mxu0 0.0
  %108 = vmatpush1.msra.mxu0 0.0
  %109 = vmatprep.subr.mxu0 0.0
  %110 = vmatpush1.msra.mxu0 0.0
  %111 = vmatprep.subr.mxu0 0.0
  %112 = vmatpush1.msra.mxu0 0.0
  %113 = vmatprep.subr.mxu0 0.0
  %114 = vmatpush1.msra.mxu0 0.0
  %115 = vmatprep.subr.mxu0 0.0
  %116 = vmatpush1.msra.mxu0 0.0
  %117 = vmatprep.subr.mxu0 0.0
  %118 = vmatpush1.msra.mxu0 0.0
  %119 = vmatprep.mubr.f32.mxu0 0.0
  %120 = vmatmul.mubr.f32.gmra.mrb[0].mxu0 %v49
  %v121 = vpop.f32.mrb[0].mxu0
  %v122 = vadd.f32 %v45, %v121
  %v123 = vpop.f32.mrb[0].mxu0
  %124 = vdwg.mxu0
  %v125 = vmax.f32 %v122, 0.0
  %v126 = vld [vmem:[%s3] sm:$0xff]
  %v127 = vld [vmem:[%s3 + $0x8] sm:$0xff]
  %v128 = vld [vmem:[%s3 + $0x10] sm:$0xff]
  %v129 = vld [vmem:[%s3 + $0x18] sm:$0xff]
  %v130 = vld [vmem:[%s3 + $0x20] sm:$0xff]
  %v131 = vld [vmem:[%s3 + $0x28] sm:$0xff]
  %v132 = vld [vmem:[%s3 + $0x30] sm:$0xff]
  %v133 = vld [vmem:[%s3 + $0x38] sm:$0xff]
  %v134 = vld [vmem:[%s4] sm:$0x1]
  %v136 = vlaneseq
  %v137 = vshrl.u32 %v136, 7
  %v138 = vsub.s32 0, %v137
  %v139 = vrot.slane %v134, %v138
  %vm141 = vcmask 523264
  %v143 = vsel %vm141, %v125, 0
  %145 = vmatprep.subr.mxu0 0.0
  %146 = vmatpush1.msra.mxu0 %v126
  %147 = vmatprep.subr.mxu0 0.0
  %148 = vmatpush1.msra.mxu0 %v127
  %149 = vmatprep.subr.mxu0 0.0
  %150 = vmatpush1.msra.mxu0 %v128
  %151 = vmatprep.subr.mxu0 0.0
  %152 = vmatpush1.msra.mxu0 %v129
  %153 = vmatprep.subr.mxu0 0.0
  %154 = vmatpush1.msra.mxu0 %v130
  %155 = vmatprep.subr.mxu0 0.0
  %156 = vmatpush1.msra.mxu0 %v131
  %157 = vmatprep.subr.mxu0 0.0
  %158 = vmatpush1.msra.mxu0 %v132
  %159 = vmatprep.subr.mxu0 0.0
  %160 = vmatpush1.msra.mxu0 %v133
  %161 = vmatprep.subr.mxu0 0.0
  %162 = vmatpush1.msra.mxu0 0.0
  %163 = vmatprep.subr.mxu0 0.0
  %164 = vmatpush1.msra.mxu0 0.0
  %165 = vmatprep.subr.mxu0 0.0
  %166 = vmatpush1.msra.mxu0 0.0
  %167 = vmatprep.subr.mxu0 0.0
  %168 = vmatpush1.msra.mxu0 0.0
  %169 = vmatprep.subr.mxu0 0.0
  %170 = vmatpush1.msra.mxu0 0.0
  %171 = vmatprep.subr.mxu0 0.0
  %172 = vmatpush1.msra.mxu0 0.0
  %173 = vmatprep.subr.mxu0 0.0
  %174 = vmatpush1.msra.mxu0 0.0
  %175 = vmatprep.subr.mxu0 0.0
  %176 = vmatpush1.msra.mxu0 0.0
  %177 = vmatprep.subr.mxu0 0.0
  %178 = vmatpush1.msra.mxu0 0.0
  %179 = vmatprep.subr.mxu0 0.0
  %180 = vmatpush1.msra.mxu0 0.0
  %181 = vmatprep.subr.mxu0 0.0
  %182 = vmatpush1.msra.mxu0 0.0
  %183 = vmatprep.subr.mxu0 0.0
  %184 = vmatpush1.msra.mxu0 0.0
  %185 = vmatprep.subr.mxu0 0.0
  %186 = vmatpush1.msra.mxu0 0.0
  %187 = vmatprep.subr.mxu0 0.0
  %188 = vmatpush1.msra.mxu0 0.0
  %189 = vmatprep.subr.mxu0 0.0
  %190 = vmatpush1.msra.mxu0 0.0
  %191 = vmatprep.subr.mxu0 0.0
  %192 = vmatpush1.msra.mxu0 0.0
  %193 = vmatprep.subr.mxu0 0.0
  %194 = vmatpush1.msra.mxu0 0.0
  %195 = vmatprep.subr.mxu0 0.0
  %196 = vmatpush1.msra.mxu0 0.0
  %197 = vmatprep.subr.mxu0 0.0
  %198 = vmatpush1.msra.mxu0 0.0
  %199 = vmatprep.subr.mxu0 0.0
  %200 = vmatpush1.msra.mxu0 0.0
  %201 = vmatprep.subr.mxu0 0.0
  %202 = vmatpush1.msra.mxu0 0.0
  %203 = vmatprep.subr.mxu0 0.0
  %204 = vmatpush1.msra.mxu0 0.0
  %205 = vmatprep.subr.mxu0 0.0
  %206 = vmatpush1.msra.mxu0 0.0
  %207 = vmatprep.subr.mxu0 0.0
  %208 = vmatpush1.msra.mxu0 0.0
  %209 = vmatprep.mubr.f32.mxu0 0.0
  %210 = vmatmul.mubr.f32.gmra.mrb[0].mxu0 %v143
  %v211 = vpop.f32.mrb[0].mxu0
  %v212 = vadd.f32 %v139, %v211
  %v213 = vpop.f32.mrb[0].mxu0
  %214 = vdwg.mxu0
  %v215 = vmax.f32 %v212, 0.0
  %v216 = vld [vmem:[%s5] sm:$0xff]
  %v217 = vld [vmem:[%s5 + $0x8] sm:$0xff]
  %v218 = vld [vmem:[%s5 + $0x10] sm:$0xff]
  %v219 = vld [vmem:[%s5 + $0x18] sm:$0xff]
  %v220 = vld [vmem:[%s5 + $0x20] sm:$0xff]
  %v221 = vld [vmem:[%s5 + $0x28] sm:$0xff]
  %v222 = vld [vmem:[%s5 + $0x30] sm:$0xff]
  %v223 = vld [vmem:[%s5 + $0x38] sm:$0xff]
  %v224 = vld [vmem:[%s6] sm:$0x1]
  %v226 = vlaneseq
  %v227 = vshrl.u32 %v226, 7
  %v228 = vsub.s32 0, %v227
  %v229 = vrot.slane %v224, %v228
  %v232 = vsel %vm141, %v215, 0
  %234 = vmatprep.subr.mxu0 0.0
  %235 = vmatpush1.msra.mxu0 %v216
  %236 = vmatprep.subr.mxu0 0.0
  %237 = vmatpush1.msra.mxu0 %v217
  %238 = vmatprep.subr.mxu0 0.0
  %239 = vmatpush1.msra.mxu0 %v218
  %240 = vmatprep.subr.mxu0 0.0
  %241 = vmatpush1.msra.mxu0 %v219
  %242 = vmatprep.subr.mxu0 0.0
  %243 = vmatpush1.msra.mxu0 %v220
  %244 = vmatprep.subr.mxu0 0.0
  %245 = vmatpush1.msra.mxu0 %v221
  %246 = vmatprep.subr.mxu0 0.0
  %247 = vmatpush1.msra.mxu0 %v222
  %248 = vmatprep.subr.mxu0 0.0
  %249 = vmatpush1.msra.mxu0 %v223
  %250 = vmatprep.subr.mxu0 0.0
  %251 = vmatpush1.msra.mxu0 0.0
  %252 = vmatprep.subr.mxu0 0.0
  %253 = vmatpush1.msra.mxu0 0.0
  %254 = vmatprep.subr.mxu0 0.0
  %255 = vmatpush1.msra.mxu0 0.0
  %256 = vmatprep.subr.mxu0 0.0
  %257 = vmatpush1.msra.mxu0 0.0
  %258 = vmatprep.subr.mxu0 0.0
  %259 = vmatpush1.msra.mxu0 0.0
  %260 = vmatprep.subr.mxu0 0.0
  %261 = vmatpush1.msra.mxu0 0.0
  %262 = vmatprep.subr.mxu0 0.0
  %263 = vmatpush1.msra.mxu0 0.0
  %264 = vmatprep.subr.mxu0 0.0
  %265 = vmatpush1.msra.mxu0 0.0
  %266 = vmatprep.subr.mxu0 0.0
  %267 = vmatpush1.msra.mxu0 0.0
  %268 = vmatprep.subr.mxu0 0.0
  %269 = vmatpush1.msra.mxu0 0.0
  %270 = vmatprep.subr.mxu0 0.0
  %271 = vmatpush1.msra.mxu0 0.0
  %272 = vmatprep.subr.mxu0 0.0
  %273 = vmatpush1.msra.mxu0 0.0
  %274 = vmatprep.subr.mxu0 0.0
  %275 = vmatpush1.msra.mxu0 0.0
  %276 = vmatprep.subr.mxu0 0.0
  %277 = vmatpush1.msra.mxu0 0.0
  %278 = vmatprep.subr.mxu0 0.0
  %279 = vmatpush1.msra.mxu0 0.0
  %280 = vmatprep.subr.mxu0 0.0
  %281 = vmatpush1.msra.mxu0 0.0
  %282 = vmatprep.subr.mxu0 0.0
  %283 = vmatpush1.msra.mxu0 0.0
  %284 = vmatprep.subr.mxu0 0.0
  %285 = vmatpush1.msra.mxu0 0.0
  %286 = vmatprep.subr.mxu0 0.0
  %287 = vmatpush1.msra.mxu0 0.0
  %288 = vmatprep.subr.mxu0 0.0
  %289 = vmatpush1.msra.mxu0 0.0
  %290 = vmatprep.subr.mxu0 0.0
  %291 = vmatpush1.msra.mxu0 0.0
  %292 = vmatprep.subr.mxu0 0.0
  %293 = vmatpush1.msra.mxu0 0.0
  %294 = vmatprep.subr.mxu0 0.0
  %295 = vmatpush1.msra.mxu0 0.0
  %296 = vmatprep.subr.mxu0 0.0
  %297 = vmatpush1.msra.mxu0 0.0
  %298 = vmatprep.mubr.f32.mxu0 0.0
  %299 = vmatmul.mubr.f32.gmra.mrb[0].mxu0 %v232
  %v300 = vpop.f32.mrb[0].mxu0
  %v301 = vadd.f32 %v229, %v300
  %v302 = vpop.f32.mrb[0].mxu0
  %303 = vdwg.mxu0
  %305 = vrot.lane.b32.xlu0 %v301, 1
  %v306 = vpop.permute.xlu0 %305
  %v308 = vsub.f32 %v301, %v306
  %v309 = vmax.f32 %v308, 0.0
  %v310 = vand.u32 2147483647, %v308
  %v311 = vsub.f32 0.0, %v310
  %v312 = vmul.f32 %v311, 1.442695
  %v313 = vpow.pop %v312
  %v314 = vadd.f32 %v313, 1.0
  %v315 = vlog2.pop %v314
  %v316 = vmul.f32 %v315, 0.6931472
  %v317 = vmul.f32 -0.5, %v313
  %v318 = vadd.f32 %v317, 1.0
  %v319 = vmul.f32 %v318, %v313
  %v320 = vand.u32 2147483647, %v313
  %vm321 = vcmp.lt.f32.partialorder %v320, 0.0004427343
  %v322 = vsel %vm321, %v319, %v316
  %v323 = vadd.f32 %v309, %v322
  %325 = vrot.lane.b32.xlu0 %v323, 127
  %v326 = vpop.permute.xlu0 %325
  %v328 = vadd.f32 %v301, %v326
  %330 = vset.pattern.permute.xlu0 0
  %331 = vperm.xlu0 %330, %v328
  %v332 = vpop.permute.xlu0 %331
  %v334 = vsub.f32 %v301, %v332
  %vm335 = vcmask 15360
  %336 = vst.msk [vmem:[%s7] sm:$0xff] %vm335, %v334
  // Predicated region
  $region30: #{tpu_custom_call.1} parent=0 // pred_check
    _
  $region31: #{tpu_custom_call.1} parent=0 // pred_check_branch
    %338 = sbr.rel (0) target = $region33
  $region32: #{tpu_custom_call.1} parent=0 // pred_region
    _
  $region33: #{tpu_custom_call.1} parent=0 // pred_fallthru
    _
  // Predicated region
  $region34: #{tpu_custom_call.1} parent=0 // pred_check
    _
  $region35: #{tpu_custom_call.1} parent=0 // pred_check_branch
    %340 = sbr.rel (0) target = $region37
  $region36: #{tpu_custom_call.1} parent=0 // pred_region
    _
  $region37: #{tpu_custom_call.1} parent=0 // pred_fallthru
    _

</llo_original>
